<compile_context>
chip_gen: v7x
topology: tpu7x:2x2x1
jax: 0.10.0
libtpu: 0.0.40
codegen_flags: <defaults>
</compile_context>

<pallas_src>
import jax
import jax.numpy as jnp
import numpy as np
from jax.experimental import pallas as pl
from jax.experimental.pallas import tpu as pltpu


def _make_kernel(K, d, T, pad, C):
    """Fused TempAw_Block kernel for one batch element (channels-last)."""

    def kernel(x_ref, w1_ref, t1_ref, w2_ref, t2_ref, o_ref):
        # x_ref:  (1, T, C) unpadded input tile
        # wX_ref: (K*C, C)  conv taps stacked along the contraction dim, BN scale folded in (bf16)
        # tX_ref: (1, C)    folded bias+BN shift (f32)
        x = x_ref[0].astype(jnp.float32)                                  # (T, C)
        zpad = jnp.zeros((pad, C), jnp.float32)

        def causal_slab(h):
            # Build the (T, K*C) slab of K causally-shifted views of h, in registers.
            hp = jnp.concatenate([zpad, h], axis=0)                       # (T+pad, C)
            return jnp.concatenate([hp[k * d:k * d + T, :] for k in range(K)], axis=1)

        # ---- conv1 (+ folded BN) + ReLU : one MXU matmul, bf16 in / f32 acc ----
        h1 = jnp.dot(causal_slab(x).astype(jnp.bfloat16), w1_ref[...],
                     preferred_element_type=jnp.float32) + t1_ref[...]
        h1 = jnp.maximum(h1, 0.0)                                         # (T, C)
        # TODO(synk): Dropout1d is stochastic in training; identity here (eval mode).

        # ---- conv2 (+ folded BN) + ReLU + Sigmoid ----
        h2 = jnp.dot(causal_slab(h1).astype(jnp.bfloat16), w2_ref[...],
                     preferred_element_type=jnp.float32) + t2_ref[...]
        h2 = jnp.maximum(h2, 0.0)
        gate = jax.nn.sigmoid(h2)

        # y = x * sigmoid(...)
        # NOTE: with C=8 the output store is lane-masked; at larger T*C consider a
        # lane-dense (B, T*C) out_spec (flagged, not worth the relayout at this size).
        o_ref[0] = (x * gate).astype(o_ref.dtype)

    return kernel


def fold_conv_bn(w, conv_b, gamma, beta, mean, var, eps=1e-5):
    """Fold inference-mode BN into conv weights/bias.

    w: (K, C_in, C_out) (== torch weight (C_out, C_in, K) transposed), conv_b: (C_out,)
    Returns w' (K*C_in, C_out) bf16 with BN scale folded per output channel, and
    shift' (1, C_out) f32 with conv bias folded into the BN shift.
    """
    scale = gamma / jnp.sqrt(var + eps)                  # (C,)
    shift = beta - mean * scale                          # (C,)
    K, Cin, Cout = w.shape
    w_folded = (w * scale[None, None, :]).reshape(K * Cin, Cout).astype(jnp.bfloat16)
    shift_folded = (shift + conv_b * scale).reshape(1, Cout).astype(jnp.float32)
    return w_folded, shift_folded


def tempaw_block(x_ncw, w1f, t1f, w2f, t2f, kernel_size, dilation):
    """x_ncw: (B, C, T) float32, PyTorch NCW convention. Returns (B, C, T)."""
    B, C, T = x_ncw.shape
    pad = (kernel_size - 1) * dilation

    x_tc = jnp.transpose(x_ncw, (0, 2, 1)).astype(jnp.float32)            # (B, T, C)

    kernel = _make_kernel(kernel_size, dilation, T, pad, C)
    w_spec = pl.BlockSpec((kernel_size * C, C), lambda b: (0, 0))
    vec_spec = pl.BlockSpec((1, C), lambda b: (0, 0))

    out = pl.pallas_call(
        kernel,
        out_shape=jax.ShapeDtypeStruct((B, T, C), jnp.float32),
        grid=(B,),
        in_specs=[
            pl.BlockSpec((1, T, C), lambda b: (b, 0, 0)),   # input (unpadded)
            w_spec, vec_spec,                               # conv1+BN1 folded
            w_spec, vec_spec,                               # conv2+BN2 folded
        ],
        out_specs=pl.BlockSpec((1, T, C), lambda b: (b, 0, 0)),
        compiler_params=pltpu.CompilerParams(dimension_semantics=("parallel",)),
    )(x_tc, w1f, t1f, w2f, t2f)

    return jnp.transpose(out, (0, 2, 1))                                  # (B, C, T)


# ---------------------------------------------------------------------------
# References for verification
# ---------------------------------------------------------------------------

def ref_forward_folded(x_ncw, w1f, t1f, w2f, t2f, K, d):
    """Pure-JAX reference with the SAME folded-BN / bf16-matmul semantics as the kernel."""
    B, C, T = x_ncw.shape
    pad = (K - 1) * d
    x_tc = jnp.transpose(x_ncw, (0, 2, 1)).astype(jnp.float32)

    def causal_slab(h):
        hp = jnp.pad(h, ((0, 0), (pad, 0), (0, 0)))
        return jnp.concatenate([hp[:, k * d:k * d + T, :] for k in range(K)], axis=-1)

    h1 = jnp.maximum(
        jnp.einsum("btk,kc->btc", causal_slab(x_tc).astype(jnp.bfloat16), w1f,
                   preferred_element_type=jnp.float32) + t1f, 0.0)
    h2 = jnp.maximum(
        jnp.einsum("btk,kc->btc", causal_slab(h1).astype(jnp.bfloat16), w2f,
                   preferred_element_type=jnp.float32) + t2f, 0.0)
    y = x_tc * jax.nn.sigmoid(h2)
    return jnp.transpose(y, (0, 2, 1))


def ref_forward_f32(x_ncw, params, K, d, eps=1e-5):
    """Full-precision torch-semantics reference: conv -> BN(eval) -> ReLU, x2, sigmoid, gate."""
    (w1, b1, g1, be1, m1, v1, w2, b2, g2, be2, m2, v2) = params
    B, C, T = x_ncw.shape
    pad = (K - 1) * d
    x_tc = jnp.transpose(x_ncw, (0, 2, 1)).astype(jnp.float32)

    def conv_bn_relu(h, w, b, gamma, beta, mean, var):
        hp = jnp.pad(h, ((0, 0), (pad, 0), (0, 0)))
        acc = sum(jnp.einsum("btc,cf->btf", hp[:, k * d:k * d + T, :], w[k])
                  for k in range(K)) + b
        scale = gamma / jnp.sqrt(var + eps)
        return jnp.maximum((acc - mean) * scale + beta, 0.0)

    h1 = conv_bn_relu(x_tc, w1, b1, g1, be1, m1, v1)
    h2 = conv_bn_relu(h1, w2, b2, g2, be2, m2, v2)
    y = x_tc * jax.nn.sigmoid(h2)
    return jnp.transpose(y, (0, 2, 1))


if __name__ == "__main__":
    # Small shapes consistent with the module: n_filter channels, 1-D sequence.
    B, C, T = 2, 8, 16           # batch, n_filter, sequence length
    K, d = 3, 2                  # kernel_size, dilation_rate

    key = jax.random.PRNGKey(0)
    ks = jax.random.split(key, 13)

    x = jax.random.normal(ks[0], (B, C, T), jnp.float32)

    fan_in = C * K
    # Conv weights stored as (K, C_in, C_out) == torch weight (C_out, C_in, K) transposed.
    w1 = jax.random.normal(ks[1], (K, C, C), jnp.float32) / np.sqrt(fan_in)
    cb1 = 0.1 * jax.random.normal(ks[2], (C,), jnp.float32)
    w2 = jax.random.normal(ks[3], (K, C, C), jnp.float32) / np.sqrt(fan_in)
    cb2 = 0.1 * jax.random.normal(ks[4], (C,), jnp.float32)

    # BatchNorm1d params (inference mode, deterministic synthetic running stats).
    g1 = 1.0 + 0.1 * jax.random.normal(ks[5], (C,), jnp.float32)
    be1 = 0.05 * jax.random.normal(ks[6], (C,), jnp.float32)
    m1 = 0.1 * jax.random.normal(ks[7], (C,), jnp.float32)
    v1 = 0.75 + 0.5 * jax.random.uniform(ks[8], (C,), jnp.float32)
    g2 = 1.0 + 0.1 * jax.random.normal(ks[9], (C,), jnp.float32)
    be2 = 0.05 * jax.random.normal(ks[10], (C,), jnp.float32)
    m2 = 0.1 * jax.random.normal(ks[11], (C,), jnp.float32)
    v2 = 0.75 + 0.5 * jax.random.uniform(ks[12], (C,), jnp.float32)

    # Wrapper-side folding: BN scale -> weights (bf16), conv bias -> BN shift (f32).
    w1f, t1f = fold_conv_bn(w1, cb1, g1, be1, m1, v1)
    w2f, t2f = fold_conv_bn(w2, cb2, g2, be2, m2, v2)

    y = tempaw_block(x, w1f, t1f, w2f, t2f, K, d)
    y = jax.block_until_ready(y)
    y_np = np.asarray(y)

    # Tight check vs. a pure-JAX reference with identical folded/bf16-matmul semantics.
    y_ref = np.asarray(ref_forward_folded(x, w1f, t1f, w2f, t2f, K, d))
    np.testing.assert_allclose(y_np, y_ref, rtol=1e-4, atol=1e-4)

    # Semantics check vs. the full-precision (conv->BN->ReLU)x2->sigmoid->gate reference;
    # looser tolerance accounts for the bf16 MXU matmul inputs.
    y_ref_f32 = np.asarray(ref_forward_f32(
        x, (w1, cb1, g1, be1, m1, v1, w2, cb2, g2, be2, m2, v2), K, d))
    np.testing.assert_allclose(y_np, y_ref_f32, rtol=5e-2, atol=5e-2)

    print("KERNEL_OK")
</pallas_src>

<mosaic_0001>
module attributes {stable_mosaic.version = 11 : i64} {
  func.func @kernel(%arg0: i32, %arg1: memref<1x16x8xf32, #tpu.memory_space<vmem>>, %arg2: memref<24x8xbf16, #tpu.memory_space<vmem>>, %arg3: memref<1x8xf32, #tpu.memory_space<vmem>>, %arg4: memref<24x8xbf16, #tpu.memory_space<vmem>>, %arg5: memref<1x8xf32, #tpu.memory_space<vmem>>, %arg6: memref<1x16x8xf32, #tpu.memory_space<vmem>>) attributes {dimension_semantics = [#tpu.dimension_semantics<parallel>], iteration_bounds = array<i64: 2>, scalar_prefetch = 0 : i64, scratch_operands = 0 : i64, tpu.core_type = #tpu.core_type<tc>, window_params = [{transform_indices = @transform_0, window_bounds = array<i64: 1, 16, 8>}, {pipeline_mode = #tpu.pipeline_mode<synchronous>, transform_indices = @transform_1, window_bounds = array<i64: 24, 8>}, {pipeline_mode = #tpu.pipeline_mode<synchronous>, transform_indices = @transform_2, window_bounds = array<i64: 1, 8>}, {pipeline_mode = #tpu.pipeline_mode<synchronous>, transform_indices = @transform_3, window_bounds = array<i64: 24, 8>}, {pipeline_mode = #tpu.pipeline_mode<synchronous>, transform_indices = @transform_4, window_bounds = array<i64: 1, 8>}, {transform_indices = @transform_5, window_bounds = array<i64: 1, 16, 8>}]} {
    %c0 = arith.constant 0 : index
    %c0_0 = arith.constant 0 : index
    %c0_1 = arith.constant 0 : index
    %0 = vector.load %arg1[%c0, %c0_0, %c0_1] : memref<1x16x8xf32, #tpu.memory_space<vmem>>, vector<1x16x8xf32>
    %1 = vector.shape_cast %0 : vector<1x16x8xf32> to vector<16x8xf32>
    %cst = arith.constant 0.000000e+00 : f32
    %2 = vector.broadcast %cst : f32 to vector<4x8xf32>
    %3 = tpu.concatenate %2, %1 in 0 : vector<4x8xf32>, vector<16x8xf32> -> vector<20x8xf32>
    %4 = vector.extract_strided_slice %3 {offsets = [0, 0], sizes = [16, 8], strides = [1, 1]} : vector<20x8xf32> to vector<16x8xf32>
    %5 = vector.extract_strided_slice %3 {offsets = [2, 0], sizes = [16, 8], strides = [1, 1]} : vector<20x8xf32> to vector<16x8xf32>
    %6 = vector.extract_strided_slice %3 {offsets = [4, 0], sizes = [16, 8], strides = [1, 1]} : vector<20x8xf32> to vector<16x8xf32>
    %7 = tpu.concatenate %4, %5, %6 in 1 : vector<16x8xf32>, vector<16x8xf32>, vector<16x8xf32> -> vector<16x24xf32>
    %8 = arith.truncf %7 : vector<16x24xf32> to vector<16x24xbf16>
    %c0_2 = arith.constant 0 : index
    %c0_3 = arith.constant 0 : index
    %9 = vector.load %arg2[%c0_2, %c0_3] : memref<24x8xbf16, #tpu.memory_space<vmem>>, vector<24x8xbf16>
    %cst_4 = arith.constant dense<0.000000e+00> : vector<16x8xf32>
    %10 = tpu.matmul %8, %9, %cst_4 {dimension_numbers = #tpu.dot_dimension_numbers<[1], [0], [0], [1], [0, 0, 1, 1], [], []>} : vector<16x24xbf16>, vector<24x8xbf16>, vector<16x8xf32> -> vector<16x8xf32>
    %c0_5 = arith.constant 0 : index
    %c0_6 = arith.constant 0 : index
    %11 = vector.load %arg3[%c0_5, %c0_6] : memref<1x8xf32, #tpu.memory_space<vmem>>, vector<1x8xf32>
    %12 = vector.broadcast %11 : vector<1x8xf32> to vector<16x8xf32>
    %13 = arith.addf %10, %12 : vector<16x8xf32>
    %cst_7 = arith.constant 0.000000e+00 : f32
    %14 = vector.broadcast %cst_7 : f32 to vector<16x8xf32>
    %15 = arith.maximumf %13, %14 : vector<16x8xf32>
    %16 = tpu.concatenate %2, %15 in 0 : vector<4x8xf32>, vector<16x8xf32> -> vector<20x8xf32>
    %17 = vector.extract_strided_slice %16 {offsets = [0, 0], sizes = [16, 8], strides = [1, 1]} : vector<20x8xf32> to vector<16x8xf32>
    %18 = vector.extract_strided_slice %16 {offsets = [2, 0], sizes = [16, 8], strides = [1, 1]} : vector<20x8xf32> to vector<16x8xf32>
    %19 = vector.extract_strided_slice %16 {offsets = [4, 0], sizes = [16, 8], strides = [1, 1]} : vector<20x8xf32> to vector<16x8xf32>
    %20 = tpu.concatenate %17, %18, %19 in 1 : vector<16x8xf32>, vector<16x8xf32>, vector<16x8xf32> -> vector<16x24xf32>
    %21 = arith.truncf %20 : vector<16x24xf32> to vector<16x24xbf16>
    %c0_8 = arith.constant 0 : index
    %c0_9 = arith.constant 0 : index
    %22 = vector.load %arg4[%c0_8, %c0_9] : memref<24x8xbf16, #tpu.memory_space<vmem>>, vector<24x8xbf16>
    %cst_10 = arith.constant dense<0.000000e+00> : vector<16x8xf32>
    %23 = tpu.matmul %21, %22, %cst_10 {dimension_numbers = #tpu.dot_dimension_numbers<[1], [0], [0], [1], [0, 0, 1, 1], [], []>} : vector<16x24xbf16>, vector<24x8xbf16>, vector<16x8xf32> -> vector<16x8xf32>
    %c0_11 = arith.constant 0 : index
    %c0_12 = arith.constant 0 : index
    %24 = vector.load %arg5[%c0_11, %c0_12] : memref<1x8xf32, #tpu.memory_space<vmem>>, vector<1x8xf32>
    %25 = vector.broadcast %24 : vector<1x8xf32> to vector<16x8xf32>
    %26 = arith.addf %23, %25 : vector<16x8xf32>
    %cst_13 = arith.constant 0.000000e+00 : f32
    %27 = vector.broadcast %cst_13 : f32 to vector<16x8xf32>
    %28 = arith.maximumf %26, %27 : vector<16x8xf32>
    %29 = arith.negf %28 : vector<16x8xf32>
    %30 = math.exp %29 : vector<16x8xf32>
    %cst_14 = arith.constant 1.000000e+00 : f32
    %31 = vector.broadcast %cst_14 : f32 to vector<16x8xf32>
    %32 = arith.addf %31, %30 : vector<16x8xf32>
    %33 = arith.divf %31, %32 : vector<16x8xf32>
    %34 = arith.mulf %1, %33 : vector<16x8xf32>
    %c0_15 = arith.constant 0 : index
    %c0_16 = arith.constant 0 : index
    %c0_17 = arith.constant 0 : index
    %35 = vector.load %arg6[%c0_15, %c0_16, %c0_17] : memref<1x16x8xf32, #tpu.memory_space<vmem>>, vector<1x16x8xf32>
    %36 = vector.shape_cast %35 : vector<1x16x8xf32> to vector<16x8xf32>
    %37 = vector.shape_cast %34 : vector<16x8xf32> to vector<1x16x8xf32>
    tpu.vector_store %arg6[%c0_15, %c0_16, %c0_17], %37 {strides = array<i32>} : memref<1x16x8xf32, #tpu.memory_space<vmem>>, vector<1x16x8xf32>,
    return
  }
  func.func @transform_0(%arg0: i32) -> (i32, i32, i32) {
    %c0_i32 = arith.constant 0 : i32
    %c0_i32_0 = arith.constant 0 : i32
    %c0_i32_1 = arith.constant 0 : i32
    return %arg0, %c0_i32, %c0_i32_0 : i32, i32, i32
  }
  func.func @transform_1(%arg0: i32) -> (i32, i32) {
    %c0_i32 = arith.constant 0 : i32
    %c0_i32_0 = arith.constant 0 : i32
    %c0_i32_1 = arith.constant 0 : i32
    return %c0_i32, %c0_i32_0 : i32, i32
  }
  func.func @transform_2(%arg0: i32) -> (i32, i32) {
    %c0_i32 = arith.constant 0 : i32
    %c0_i32_0 = arith.constant 0 : i32
    %c0_i32_1 = arith.constant 0 : i32
    return %c0_i32, %c0_i32_0 : i32, i32
  }
  func.func @transform_3(%arg0: i32) -> (i32, i32) {
    %c0_i32 = arith.constant 0 : i32
    %c0_i32_0 = arith.constant 0 : i32
    %c0_i32_1 = arith.constant 0 : i32
    return %c0_i32, %c0_i32_0 : i32, i32
  }
  func.func @transform_4(%arg0: i32) -> (i32, i32) {
    %c0_i32 = arith.constant 0 : i32
    %c0_i32_0 = arith.constant 0 : i32
    %c0_i32_1 = arith.constant 0 : i32
    return %c0_i32, %c0_i32_0 : i32, i32
  }
  func.func @transform_5(%arg0: i32) -> (i32, i32, i32) {
    %c0_i32 = arith.constant 0 : i32
    %c0_i32_0 = arith.constant 0 : i32
    %c0_i32_1 = arith.constant 0 : i32
    return %arg0, %c0_i32, %c0_i32_0 : i32, i32, i32
  }
}

</mosaic_0001>

<llo_original>
// kernel: tpu_custom_call.1
$region0: #{tpu_custom_call.1}
  #allocation0 [shape = 'u32[]', space=smem, size = 0x4, offset = 0x4, fixed_abs, tag = 'smem constant byte address 0x4 - core index']
  #allocation1 [shape = 'u32[144,128]{1,0:T(1,128)}', space=vmem, size = 0x12000, scoped, tag = 'internal scratch']
  %s0 = inlined_call_operand.vmem [shape: f32[2,16,8], index: 0, kind: input, shape index: {}]
  %s1 = inlined_call_operand.vmem [shape: bf16[24,8], index: 1, kind: input, shape index: {}]
  %s2 = inlined_call_operand.vmem [shape: f32[1,8], index: 2, kind: input, shape index: {}]
  %s3 = inlined_call_operand.vmem [shape: bf16[24,8], index: 3, kind: input, shape index: {}]
  %s4 = inlined_call_operand.vmem [shape: f32[1,8], index: 4, kind: input, shape index: {}]
  %s5 = inlined_call_operand.vmem [shape: f32[2,16,8], index: 5, kind: output, shape index: {}]
  %s6 = sld [smem:[#allocation0]]
  $region53: #{tpu_custom_call.1} parent=0
    _
  %s8 = ssub.s32 1, %s6
  %s9 = scalar_select 0, %s8, %s6
  loop: start=0, step=1, limit=4
  $region2: #{tpu_custom_call.1} parent=0 // loop_pre_header
    _
  $region3: #{tpu_custom_call.1} parent=0 // loop_header
    %s11 = sphi 0, %s15
    %p12 = scmp.ge.s32.totalorder %s11, 4
    %s21 = sphi 0, %s23
    %s24 = sphi 0, %s21
    %s25 = sphi 0, %s24
    %s41 = sphi 0, %s25
    %s45 = sphi 0, %s45
    %s47 = sphi 0, %s45
    %s48 = sphi 0, %s47
    %s62 = sphi 0, %s48
    %s66 = sphi 0, %s66
    %s68 = sphi 0, %s66
    %s69 = sphi 0, %s68
    %s83 = sphi 0, %s69
    %s87 = sphi 0, %s87
    %s89 = sphi 0, %s87
    %s90 = sphi 0, %s89
    %s104 = sphi 0, %s90
    %s108 = sphi 0, %s108
    %s110 = sphi 0, %s108
    %s111 = sphi 0, %s110
    %s125 = sphi 0, %s111
    %s131 = sphi 0, %s133
    %s134 = sphi 0, %s131
    %s135 = sphi 0, %s134
    %s151 = sphi 0, %s135
  $region4: #{tpu_custom_call.1} parent=0 // loop_header_branch
    %14 = sbr.rel (%p12) target = $region8
  $region5: #{tpu_custom_call.1} parent=0 // loop_body
    %s16 = ssub.s32 %s11, 1
    %s17 = ssub.s32 %s11, 2
    %s18 = sadd.s32 %s11, 1
    %s19 = ssub.s32 %s11, %s18
    %p20 = scmp.eq.s32.totalorder %s19, 0
    %s22 = sadd.s32 %s21, 1
    %s23 = scalar_select %p20, %s21, %s22
    %p26 = pneg %p20
    %p27 = scmp.eq.s32.totalorder %s11, 1
    %p28 = por %p26, %p27
    %p29 = scmp.ne.s32.totalorder %s21, %s24
    %p30 = scmp.eq.s32.totalorder %s11, 0
    %p31 = por %p29, %p30
    %p32 = scmp.ne.s32.totalorder %s21, %s24
    %p33 = scmp.eq.s32.totalorder %s16, 1
    %p34 = por %p32, %p33
    %p35 = scmp.ne.s32.totalorder %s24, %s25
    %p36 = scmp.eq.s32.totalorder %s16, 0
    %p37 = por %p35, %p36
    %p38 = scmp.ne.s32.totalorder %s24, %s25
    %p39 = scmp.eq.s32.totalorder %s17, 1
    %p40 = por %p38, %p39
    %p42 = scmp.ne.s32.totalorder %s25, %s41
    %p43 = scmp.eq.s32.totalorder %s17, 0
    %p44 = por %p42, %p43
    %s46 = sadd.s32 %s45, 1
    %p49 = scmp.eq.s32.totalorder %s11, 1
    %p50 = scmp.ne.s32.totalorder %s45, %s47
    %p51 = scmp.eq.s32.totalorder %s11, 0
    %p52 = por %p50, %p51
    %p53 = scmp.ne.s32.totalorder %s45, %s47
    %p54 = scmp.eq.s32.totalorder %s16, 1
    %p55 = por %p53, %p54
    %p56 = scmp.ne.s32.totalorder %s47, %s48
    %p57 = scmp.eq.s32.totalorder %s16, 0
    %p58 = por %p56, %p57
    %p59 = scmp.ne.s32.totalorder %s47, %s48
    %p60 = scmp.eq.s32.totalorder %s17, 1
    %p61 = por %p59, %p60
    %p63 = scmp.ne.s32.totalorder %s48, %s62
    %p64 = scmp.eq.s32.totalorder %s17, 0
    %p65 = por %p63, %p64
    %s67 = sadd.s32 %s66, 1
    %p70 = scmp.eq.s32.totalorder %s11, 1
    %p71 = scmp.ne.s32.totalorder %s66, %s68
    %p72 = scmp.eq.s32.totalorder %s11, 0
    %p73 = por %p71, %p72
    %p74 = scmp.ne.s32.totalorder %s66, %s68
    %p75 = scmp.eq.s32.totalorder %s16, 1
    %p76 = por %p74, %p75
    %p77 = scmp.ne.s32.totalorder %s68, %s69
    %p78 = scmp.eq.s32.totalorder %s16, 0
    %p79 = por %p77, %p78
    %p80 = scmp.ne.s32.totalorder %s68, %s69
    %p81 = scmp.eq.s32.totalorder %s17, 1
    %p82 = por %p80, %p81
    %p84 = scmp.ne.s32.totalorder %s69, %s83
    %p85 = scmp.eq.s32.totalorder %s17, 0
    %p86 = por %p84, %p85
    %s88 = sadd.s32 %s87, 1
    %p91 = scmp.eq.s32.totalorder %s11, 1
    %p92 = scmp.ne.s32.totalorder %s87, %s89
    %p93 = scmp.eq.s32.totalorder %s11, 0
    %p94 = por %p92, %p93
    %p95 = scmp.ne.s32.totalorder %s87, %s89
    %p96 = scmp.eq.s32.totalorder %s16, 1
    %p97 = por %p95, %p96
    %p98 = scmp.ne.s32.totalorder %s89, %s90
    %p99 = scmp.eq.s32.totalorder %s16, 0
    %p100 = por %p98, %p99
    %p101 = scmp.ne.s32.totalorder %s89, %s90
    %p102 = scmp.eq.s32.totalorder %s17, 1
    %p103 = por %p101, %p102
    %p105 = scmp.ne.s32.totalorder %s90, %s104
    %p106 = scmp.eq.s32.totalorder %s17, 0
    %p107 = por %p105, %p106
    %s109 = sadd.s32 %s108, 1
    %p112 = scmp.eq.s32.totalorder %s11, 1
    %p113 = scmp.ne.s32.totalorder %s108, %s110
    %p114 = scmp.eq.s32.totalorder %s11, 0
    %p115 = por %p113, %p114
    %p116 = scmp.ne.s32.totalorder %s108, %s110
    %p117 = scmp.eq.s32.totalorder %s16, 1
    %p118 = por %p116, %p117
    %p119 = scmp.ne.s32.totalorder %s110, %s111
    %p120 = scmp.eq.s32.totalorder %s16, 0
    %p121 = por %p119, %p120
    %p122 = scmp.ne.s32.totalorder %s110, %s111
    %p123 = scmp.eq.s32.totalorder %s17, 1
    %p124 = por %p122, %p123
    %p126 = scmp.ne.s32.totalorder %s111, %s125
    %p127 = scmp.eq.s32.totalorder %s17, 0
    %p128 = por %p126, %p127
    %s129 = ssub.s32 %s11, %s18
    %p130 = scmp.eq.s32.totalorder %s129, 0
    %s132 = sadd.s32 %s131, 1
    %s133 = scalar_select %p130, %s131, %s132
    %p136 = pneg %p130
    %p137 = scmp.eq.s32.totalorder %s11, 1
    %p138 = por %p136, %p137
    %p139 = scmp.ne.s32.totalorder %s131, %s134
    %p140 = scmp.eq.s32.totalorder %s11, 0
    %p141 = por %p139, %p140
    %p142 = scmp.ne.s32.totalorder %s131, %s134
    %p143 = scmp.eq.s32.totalorder %s16, 1
    %p144 = por %p142, %p143
    %p145 = scmp.ne.s32.totalorder %s134, %s135
    %p146 = scmp.eq.s32.totalorder %s16, 0
    %p147 = por %p145, %p146
    %p148 = scmp.ne.s32.totalorder %s134, %s135
    %p149 = scmp.eq.s32.totalorder %s17, 1
    %p150 = por %p148, %p149
    %p152 = scmp.ne.s32.totalorder %s135, %s151
    %p153 = scmp.eq.s32.totalorder %s17, 0
    %p154 = por %p152, %p153
    %p155 = scmp.le.s32.totalorder 1, %s11
    %p156 = scmp.lt.s32.totalorder %s11, 3
    %p157 = pnand %p155, %p156
    %p158 = pneg %p157
    // Predicated region
    $region9: #{tpu_custom_call.1} parent=5 // pred_check
      _
    $region10: #{tpu_custom_call.1} parent=5 // pred_check_branch
      %160 = sbr.rel (%p157) target = $region12
    $region11: #{tpu_custom_call.1} parent=5 // pred_region
      %s161 = ssub.s32 %s11, 1
      // Predicated region
      $region13: #{tpu_custom_call.1} parent=11 // pred_check
        %p162 = pneg %p58
      $region14: #{tpu_custom_call.1} parent=11 // pred_check_branch
        %164 = sbr.rel (%p162) target = $region16
      $region15: #{tpu_custom_call.1} parent=11 // pred_region
        _
      $region16: #{tpu_custom_call.1} parent=11 // pred_fallthru
        _
      // Predicated region
      $region17: #{tpu_custom_call.1} parent=11 // pred_check
        %p165 = pneg %p79
      $region18: #{tpu_custom_call.1} parent=11 // pred_check_branch
        %167 = sbr.rel (%p165) target = $region20
      $region19: #{tpu_custom_call.1} parent=11 // pred_region
        _
      $region20: #{tpu_custom_call.1} parent=11 // pred_fallthru
        _
      // Predicated region
      $region21: #{tpu_custom_call.1} parent=11 // pred_check
        %p168 = pneg %p100
      $region22: #{tpu_custom_call.1} parent=11 // pred_check_branch
        %170 = sbr.rel (%p168) target = $region24
      $region23: #{tpu_custom_call.1} parent=11 // pred_region
        _
      $region24: #{tpu_custom_call.1} parent=11 // pred_fallthru
        _
      // Predicated region
      $region25: #{tpu_custom_call.1} parent=11 // pred_check
        %p171 = pneg %p121
      $region26: #{tpu_custom_call.1} parent=11 // pred_check_branch
        %173 = sbr.rel (%p171) target = $region28
      $region27: #{tpu_custom_call.1} parent=11 // pred_region
        _
      $region28: #{tpu_custom_call.1} parent=11 // pred_fallthru
        _
    $region12: #{tpu_custom_call.1} parent=5 // pred_fallthru
      _
    %p174 = scmp.lt.s32.totalorder %s11, 2
    // Predicated region
    $region29: #{tpu_custom_call.1} parent=5 // pred_check
      %p175 = pneg %p174
    $region30: #{tpu_custom_call.1} parent=5 // pred_check_branch
      %177 = sbr.rel (%p175) target = $region32
    $region31: #{tpu_custom_call.1} parent=5 // pred_region
      // Predicated region
      $region33: #{tpu_custom_call.1} parent=31 // pred_check
        %p178 = pneg %p31
      $region34: #{tpu_custom_call.1} parent=31 // pred_check_branch
        %180 = sbr.rel (%p178) target = $region36
      $region35: #{tpu_custom_call.1} parent=31 // pred_region
        %p181 = scmp.lt.s32.totalorder %s11, 1
        %s182 = scalar_select %p181, %s11, 1
        %s183 = smul.addr %s182, 2
        %s184 = smul.addr %s183, 8
        %s185 = scalar_lea.vmem %s0, %s184
      $region36: #{tpu_custom_call.1} parent=31 // pred_fallthru
        _
    $region32: #{tpu_custom_call.1} parent=5 // pred_fallthru
      _
    %p186 = scmp.le.s32.totalorder 1, %s11
    %p187 = scmp.lt.s32.totalorder %s11, 3
    %p188 = pnand %p186, %p187
    %p189 = pneg %p188
    // Predicated region
    $region37: #{tpu_custom_call.1} parent=5 // pred_check
      _
    $region38: #{tpu_custom_call.1} parent=5 // pred_check_branch
      %191 = sbr.rel (%p188) target = $region40
    $region39: #{tpu_custom_call.1} parent=5 // pred_region
      %s192 = ssub.s32 %s11, 1
      %p193 = scmp.lt.s32.totalorder %s16, 1
      %s194 = scalar_select %p193, %s16, 1
      %s195 = smul.addr %s194, 2
      %s196 = smul.addr %s195, 8
      %s197 = scalar_lea.vmem %s0, %s196
      %p198 = pneg %p37
      %p199 = pneg %p34
      %p200 = pneg %p58
      %p201 = pneg %p55
      %p202 = pneg %p79
      %p203 = pneg %p76
      %p204 = pneg %p100
      %p205 = pneg %p97
      %p206 = pneg %p121
      %p207 = pneg %p118
      %p208 = pneg %p147
      %p209 = pneg %p144
      %p210 = scmp.lt.s32.totalorder %s16, 1
      %s211 = scalar_select %p210, %s16, 1
      %s212 = smul.addr %s211, 2
      %s213 = smul.addr %s212, 8
      %s214 = scalar_lea.vmem %s5, %s213
      %p215 = scmp.lt.s32.totalorder %s16, 1
      %s216 = scalar_select %p215, %s16, 1
      %s217 = smul.addr %s216, 2
      %s218 = smul.addr %s217, 8
      %s219 = scalar_lea.vmem %s0, %s218
      %p220 = scmp.lt.s32.totalorder %s16, 1
      %s221 = scalar_select %p220, %s16, 1
      %s222 = smul.addr %s221, 2
      %s223 = smul.addr %s222, 8
      %s224 = scalar_lea.vmem %s5, %s223
      %v226 = vld [vmem:[%s219] sm:$0xff]
      %v227 = vld [vmem:[%s219 + $0x8] sm:$0xff]
      %vm230 = vcmask 1043456
      %v231 = vrot.slane %v226, 4
      %v232 = vrot.slane %v227, 4
      %v233 = vsel %vm230, %v231, %v232
      %v236 = vsel %vm230, 0.0, %v231
      %vm238 = vcmask 1045504
      %v239 = vrot.slane %v236, 2
      %v240 = vrot.slane %v233, 2
      %v241 = vsel %vm238, %v239, %v240
      %v242 = vrot.slane %v232, 2
      %v243 = vsel %vm238, %v240, %v242
      %244 = vrot.lane.b32.xlu0 %v241, 8
      %v245 = vpop.permute.xlu0 %244
      %246 = vrot.lane.b32.xlu0 %v243, 8
      %v247 = vpop.permute.xlu0 %246
      %v250 = vrot.slane %v236, 4
      %v251 = vrot.slane %v233, 4
      %v252 = vsel %vm230, %v250, %v251
      %v253 = vrot.slane %v232, 4
      %v254 = vsel %vm230, %v251, %v253
      %255 = vrot.lane.b32.xlu0 %v252, 16
      %v256 = vpop.permute.xlu0 %255
      %257 = vrot.lane.b32.xlu0 %v254, 16
      %v258 = vpop.permute.xlu0 %257
      %vm261 = vcmask 64512
      %v262 = vsel %vm261, %v236, %v245
      %v263 = vsel %vm261, %v233, %v247
      %vm264 = vcmask 130048
      %v265 = vsel %vm264, %v262, %v256
      %v266 = vsel %vm264, %v263, %v258
      %v267 = vpack.c.bf16 %v266, %v265
      %v268 = vld [vmem:[%s1] sm:$0xf]
      %v269 = vld [vmem:[%s1 + $0x4] sm:$0xf]
      %v270 = vld [vmem:[%s1 + $0x8] sm:$0xf]
      %v271 = vld [vmem:[%s2] sm:$0x1]
      %v273 = vlaneseq
      %v274 = vshrl.u32 %v273, 7
      %v275 = vsub.s32 0, %v274
      %v276 = vrot.slane %v271, %v275
      %v281 = vunpack.c.l.b16 %v268
      %v282 = vunpack.c.l.b16 %v269
      %v283 = vunpack.c.l.b16 %v270
      %v284 = vpack.c.b16 %v282, %v281
      %v285 = vpack.c.b16 %v283, %v283
      %vm287 = vcmask 195584
      %v289 = vsel %vm287, %v267, 0
      %v292 = vsel %vm230, %v285, 0
      %294 = vmatprep.subr.bf16.mxu0 0
      %295 = vmatpush1.bf16.msra.mxu0 %v284
      %296 = vmatprep.subr.bf16.mxu0 0
      %297 = vmatpush1.bf16.msra.mxu0 %v292
      %298 = vmatprep.subr.bf16.mxu0 0
      %299 = vmatpush1.bf16.msra.mxu0 0
      %300 = vmatprep.subr.bf16.mxu0 0
      %301 = vmatpush1.bf16.msra.mxu0 0
      %302 = vmatprep.subr.bf16.mxu0 0
      %303 = vmatpush1.bf16.msra.mxu0 0
      %304 = vmatprep.subr.bf16.mxu0 0
      %305 = vmatpush1.bf16.msra.mxu0 0
      %306 = vmatprep.subr.bf16.mxu0 0
      %307 = vmatpush1.bf16.msra.mxu0 0
      %308 = vmatprep.subr.bf16.mxu0 0
      %309 = vmatpush1.bf16.msra.mxu0 0
      %310 = vmatprep.subr.bf16.mxu0 0
      %311 = vmatpush1.bf16.msra.mxu0 0
      %312 = vmatprep.subr.bf16.mxu0 0
      %313 = vmatpush1.bf16.msra.mxu0 0
      %314 = vmatprep.subr.bf16.mxu0 0
      %315 = vmatpush1.bf16.msra.mxu0 0
      %316 = vmatprep.subr.bf16.mxu0 0
      %317 = vmatpush1.bf16.msra.mxu0 0
      %318 = vmatprep.subr.bf16.mxu0 0
      %319 = vmatpush1.bf16.msra.mxu0 0
      %320 = vmatprep.subr.bf16.mxu0 0
      %321 = vmatpush1.bf16.msra.mxu0 0
      %322 = vmatprep.subr.bf16.mxu0 0
      %323 = vmatpush1.bf16.msra.mxu0 0
      %324 = vmatprep.subr.bf16.mxu0 0
      %325 = vmatpush1.bf16.msra.mxu0 0
      %326 = vmatprep.mubr.bf16.mxu0 0
      %327 = vmatmul.mubr.bf16.gmra.mrb[0].mxu0 %v289
      %v328 = vpop.f32.mrb[0].mxu0
      %v329 = vadd.f32 %v276, %v328
      %v330 = vpop.f32.mrb[0].mxu0
      %v331 = vpop.f32.mrb[0].mxu0
      %v332 = vadd.f32 %v276, %v331
      %v333 = vpop.f32.mrb[0].mxu0
      %334 = vdwg.mxu0
      %v335 = vmax.f32 %v329, 0.0
      %v336 = vmax.f32 %v332, 0.0
      %v339 = vrot.slane %v335, 4
      %v340 = vrot.slane %v336, 4
      %v341 = vsel %vm230, %v339, %v340
      %v344 = vsel %vm230, 0.0, %v339
      %v346 = vrot.slane %v344, 2
      %v347 = vrot.slane %v341, 2
      %v348 = vsel %vm238, %v346, %v347
      %v349 = vrot.slane %v340, 2
      %v350 = vsel %vm238, %v347, %v349
      %351 = vrot.lane.b32.xlu0 %v348, 8
      %v352 = vpop.permute.xlu0 %351
      %353 = vrot.lane.b32.xlu0 %v350, 8
      %v354 = vpop.permute.xlu0 %353
      %v357 = vrot.slane %v344, 4
      %v358 = vrot.slane %v341, 4
      %v359 = vsel %vm230, %v357, %v358
      %v360 = vrot.slane %v340, 4
      %v361 = vsel %vm230, %v358, %v360
      %362 = vrot.lane.b32.xlu0 %v359, 16
      %v363 = vpop.permute.xlu0 %362
      %364 = vrot.lane.b32.xlu0 %v361, 16
      %v365 = vpop.permute.xlu0 %364
      %v368 = vsel %vm261, %v344, %v352
      %v369 = vsel %vm261, %v341, %v354
      %v370 = vsel %vm264, %v368, %v363
      %v371 = vsel %vm264, %v369, %v365
      %v372 = vpack.c.bf16 %v371, %v370
      %v373 = vld [vmem:[%s3] sm:$0xf]
      %v374 = vld [vmem:[%s3 + $0x4] sm:$0xf]
      %v375 = vld [vmem:[%s3 + $0x8] sm:$0xf]
      %v376 = vld [vmem:[%s4] sm:$0x1]
      %v378 = vlaneseq
      %v379 = vshrl.u32 %v378, 7
      %v380 = vsub.s32 0, %v379
      %v381 = vrot.slane %v376, %v380
      %v386 = vunpack.c.l.b16 %v373
      %v387 = vunpack.c.l.b16 %v374
      %v388 = vunpack.c.l.b16 %v375
      %v389 = vpack.c.b16 %v387, %v386
      %v390 = vpack.c.b16 %v388, %v388
      %v393 = vsel %vm287, %v372, 0
      %v396 = vsel %vm230, %v390, 0
      %398 = vmatprep.subr.bf16.mxu0 0
      %399 = vmatpush1.bf16.msra.mxu0 %v389
      %400 = vmatprep.subr.bf16.mxu0 0
      %401 = vmatpush1.bf16.msra.mxu0 %v396
      %402 = vmatprep.subr.bf16.mxu0 0
      %403 = vmatpush1.bf16.msra.mxu0 0
      %404 = vmatprep.subr.bf16.mxu0 0
      %405 = vmatpush1.bf16.msra.mxu0 0
      %406 = vmatprep.subr.bf16.mxu0 0
      %407 = vmatpush1.bf16.msra.mxu0 0
      %408 = vmatprep.subr.bf16.mxu0 0
      %409 = vmatpush1.bf16.msra.mxu0 0
      %410 = vmatprep.subr.bf16.mxu0 0
      %411 = vmatpush1.bf16.msra.mxu0 0
      %412 = vmatprep.subr.bf16.mxu0 0
      %413 = vmatpush1.bf16.msra.mxu0 0
      %414 = vmatprep.subr.bf16.mxu0 0
      %415 = vmatpush1.bf16.msra.mxu0 0
      %416 = vmatprep.subr.bf16.mxu0 0
      %417 = vmatpush1.bf16.msra.mxu0 0
      %418 = vmatprep.subr.bf16.mxu0 0
      %419 = vmatpush1.bf16.msra.mxu0 0
      %420 = vmatprep.subr.bf16.mxu0 0
      %421 = vmatpush1.bf16.msra.mxu0 0
      %422 = vmatprep.subr.bf16.mxu0 0
      %423 = vmatpush1.bf16.msra.mxu0 0
      %424 = vmatprep.subr.bf16.mxu0 0
      %425 = vmatpush1.bf16.msra.mxu0 0
      %426 = vmatprep.subr.bf16.mxu0 0
      %427 = vmatpush1.bf16.msra.mxu0 0
      %428 = vmatprep.subr.bf16.mxu0 0
      %429 = vmatpush1.bf16.msra.mxu0 0
      %430 = vmatprep.mubr.bf16.mxu0 0
      %431 = vmatmul.mubr.bf16.gmra.mrb[0].mxu0 %v393
      %v432 = vpop.f32.mrb[0].mxu0
      %v433 = vadd.f32 %v381, %v432
      %v434 = vpop.f32.mrb[0].mxu0
      %v435 = vpop.f32.mrb[0].mxu0
      %v436 = vadd.f32 %v381, %v435
      %v437 = vpop.f32.mrb[0].mxu0
      %438 = vdwg.mxu0
      %v439 = vmax.f32 %v433, 0.0
      %v440 = vmax.f32 %v436, 0.0
      %v441 = vxor.u32 %v439, 2147483648
      %v442 = vxor.u32 %v440, 2147483648
      %v443 = vmul.f32 %v441, 1.442695
      %v444 = vpow.pop %v443
      %v445 = vmul.f32 %v442, 1.442695
      %v446 = vpow.pop %v445
      %v447 = vadd.f32 %v444, 1.0
      %v448 = vadd.f32 %v446, 1.0
      %v449 = vrcp.pop %v447
      %v450 = vmul.f32 1.0, %v449
      %v451 = vrcp.pop %v448
      %v452 = vmul.f32 1.0, %v451
      %v453 = vmul.f32 %v226, %v450
      %v454 = vmul.f32 %v227, %v452
      %455 = vst.msk [vmem:[%s224] sm:$0xff] %vm261, %v453
      %456 = vst.msk [vmem:[%s224 + $0x8] sm:$0xff] %vm261, %v454
      %p457 = scmp.lt.s32.totalorder %s16, 1
      %s458 = scalar_select %p457, %s16, 1
      %s459 = smul.addr %s458, 2
      %s460 = smul.addr %s459, 8
      %s461 = scalar_lea.vmem %s5, %s460
      // Predicated region
      $region41: #{tpu_custom_call.1} parent=39 // pred_check
        %p462 = pneg %p144
      $region42: #{tpu_custom_call.1} parent=39 // pred_check_branch
        %464 = sbr.rel (%p462) target = $region44
      $region43: #{tpu_custom_call.1} parent=39 // pred_region
        _
      $region44: #{tpu_custom_call.1} parent=39 // pred_fallthru
        _
    $region40: #{tpu_custom_call.1} parent=5 // pred_fallthru
      _
    %p465 = scmp.le.s32.totalorder 2, %s11
    // Predicated region
    $region45: #{tpu_custom_call.1} parent=5 // pred_check
      %p466 = pneg %p465
    $region46: #{tpu_custom_call.1} parent=5 // pred_check_branch
      %468 = sbr.rel (%p466) target = $region48
    $region47: #{tpu_custom_call.1} parent=5 // pred_region
      %s469 = ssub.s32 %s11, 2
      // Predicated region
      $region49: #{tpu_custom_call.1} parent=47 // pred_check
        %p470 = pneg %p150
      $region50: #{tpu_custom_call.1} parent=47 // pred_check_branch
        %472 = sbr.rel (%p470) target = $region52
      $region51: #{tpu_custom_call.1} parent=47 // pred_region
        %p473 = scmp.lt.s32.totalorder %s17, 1
        %s474 = scalar_select %p473, %s17, 1
        %s475 = smul.addr %s474, 2
        %s476 = smul.addr %s475, 8
        %s477 = scalar_lea.vmem %s5, %s476
      $region52: #{tpu_custom_call.1} parent=47 // pred_fallthru
        _
    $region48: #{tpu_custom_call.1} parent=5 // pred_fallthru
      _
  $region6: #{tpu_custom_call.1} parent=0 // loop_footer
    %s15 = sadd.s32 1, %s11
  $region7: #{tpu_custom_call.1} parent=0 // loop_footer_branch
    %10 = sbr.rel target = $region3
  $region8: #{tpu_custom_call.1} parent=0 // loop_exit
    _

</llo_original>
